<compile_context>
chip_gen: v5e
topology: v5e:2x2
jax: 0.10.0
libtpu: 0.0.40
codegen_flags: <defaults>
</compile_context>

<pallas_src>
import functools
import math

import jax
import jax.numpy as jnp
from jax.experimental import pallas as pl
from jax.experimental.pallas import tpu as pltpu

_LANES = 128


def _sublane_multiple(dtype):
    """Packed sublane count: 8 for f32, 16 for bf16, 32 for int8."""
    itemsize = jnp.dtype(dtype).itemsize
    return max(8, 32 // itemsize)


def _dma_copy_kernel(x_hbm, o_hbm, sems, *, n_chunks):
    # Identity copy: n_chunks independent HBM->HBM DMAs.  Start them all so
    # the DMA engine can pipeline, then wait on each.  No TensorCore compute.
    copies = [
        pltpu.make_async_copy(x_hbm.at[c], o_hbm.at[c], sems.at[c])
        for c in range(n_chunks)
    ]
    for cp in copies:
        cp.start()
    for cp in copies:
        cp.wait()


def _pallas_hbm_copy(slab):
    """Copy a (n_chunks, rows_per_chunk, W) slab via chunked HBM->HBM DMA."""
    n_chunks = slab.shape[0]
    total_bytes = slab.size * jnp.dtype(slab.dtype).itemsize
    return pl.pallas_call(
        functools.partial(_dma_copy_kernel, n_chunks=n_chunks),
        out_shape=jax.ShapeDtypeStruct(slab.shape, slab.dtype),
        # Raw HBM refs on both sides: no automatic HBM<->VMEM pipelining at all.
        in_specs=[pl.BlockSpec(memory_space=pl.ANY)],
        out_specs=pl.BlockSpec(memory_space=pl.ANY),
        scratch_shapes=[pltpu.SemaphoreType.DMA((n_chunks,))],
        # Advisory: pure mem-bound op, 1x read + 1x write, zero FLOPs.
        cost_estimate=pl.CostEstimate(
            flops=0, transcendentals=0, bytes_accessed=2 * total_bytes),
    )(slab)


def _pick_layout(total, dtype):
    """Choose (n_chunks, rows_per_chunk, W) for the DMA copy, or None.

    W is the widest lane-dense minor dim (multiple of 128) such that the row
    count stays a multiple of the packed-sublane group, and the chunk count
    (<= 8) keeps every chunk boundary on a whole packed-sublane group — so
    every DMA descriptor is tile-aligned for f32/bf16/int8.
    """
    pack = _sublane_multiple(dtype)
    for w in (16 * _LANES, 8 * _LANES, 4 * _LANES, 2 * _LANES, _LANES):
        if total % (pack * w) == 0:
            width = w
            break
    else:
        return None
    rows = total // width
    row_groups = rows // pack
    n_chunks = 1
    for c in (8, 7, 6, 5, 4, 3, 2):
        if row_groups % c == 0:
            n_chunks = c
            break
    return n_chunks, rows // n_chunks, width


def _resolve_size(size, total):
    """Replicate torch.Tensor.view's -1 inference and size checking."""
    size = tuple(int(s) for s in size)
    neg = [i for i, s in enumerate(size) if s == -1]
    if len(neg) > 1:
        raise ValueError("only one dimension can be inferred")
    if neg:
        known = 1
        for i, s in enumerate(size):
            if i != neg[0]:
                known *= s
        if known == 0 or total % known != 0:
            raise ValueError(f"shape {size} is invalid for input of size {total}")
        size = size[: neg[0]] + (total // known,) + size[neg[0] + 1 :]
    if math.prod(size) != total:
        raise ValueError(f"shape {size} is invalid for input of size {total}")
    return size


class View:
    """JAX/Pallas equivalent of the PyTorch View(nn.Module).

    Default forward is metadata-only (exactly torch .view() on contiguous
    data).  Set materialize_with_pallas=True to route the bytes through the
    chunked HBM->HBM DMA copy kernel (produces a fresh buffer).
    """

    def __init__(self, size, materialize_with_pallas=False):
        self.size = tuple(size) if isinstance(size, (tuple, list)) else (size,)
        self.materialize_with_pallas = materialize_with_pallas

    def __call__(self, tensor):
        total = tensor.size
        out_shape = _resolve_size(self.size, total)

        if not self.materialize_with_pallas:
            # Hot path: pure metadata reinterpretation, no kernel launch.
            return tensor.reshape(out_shape)

        layout = _pick_layout(total, tensor.dtype)
        if layout is None:
            # TODO(synk): element counts not aligned to a packed (pack, 128)
            # tile skip the opt-in DMA copy; a view has no compute so this
            # only bypasses the demo kernel, not any semantics.
            return tensor.reshape(out_shape)

        n_chunks, rows_per_chunk, width = layout
        slab = tensor.reshape(n_chunks, rows_per_chunk, width)
        copied = _pallas_hbm_copy(slab)
        return copied.reshape(out_shape)


if __name__ == "__main__":
    key = jax.random.PRNGKey(0)
    # Small NCHW-style activation: (batch=2, C=4, H=16, W=16).
    x = jax.random.normal(key, (2, 4, 16, 16), dtype=jnp.float32)
    ref = x.reshape(2, -1)

    # Default (recommended) path: metadata-only view.
    y_meta = jax.block_until_ready(View((2, -1))(x))

    # Opt-in path: exercise the Pallas HBM->HBM DMA copy kernel on TPU.
    y_dma = jax.block_until_ready(View((2, -1), materialize_with_pallas=True)(x))

    for y in (y_meta, y_dma):
        assert y.shape == (2, 4 * 16 * 16)
        assert y.dtype == x.dtype
        assert bool(jnp.all(y == ref))

    # Slightly larger (still small) slab to exercise the multi-chunk DMA path
    # (4 chunked DMAs with a 2048-wide lane-dense layout).
    x2 = jax.random.normal(jax.random.PRNGKey(0), (8, 64, 128), dtype=jnp.float32)
    y2 = jax.block_until_ready(View((-1, 128), materialize_with_pallas=True)(x2))
    assert y2.shape == (8 * 64, 128)
    assert y2.dtype == x2.dtype
    assert bool(jnp.all(y2 == x2.reshape(-1, 128)))

    print("KERNEL_OK")
</pallas_src>

<mosaic_0001>
module attributes {stable_mosaic.version = 11 : i64} {
  func.func @_dma_copy_kernel(%arg0: memref<1x8x256xf32, #tpu.memory_space<any>>, %arg1: memref<1x8x256xf32, #tpu.memory_space<any>>, %arg2: memref<1x!tpu.dma_semaphore, #tpu.memory_space<semaphore_mem>>) attributes {dimension_semantics = [], scalar_prefetch = 0 : i64, scratch_operands = 1 : i64, tpu.core_type = #tpu.core_type<tc>} {
    %c0_i32 = arith.constant 0 : i32
    %c0_i32_0 = arith.constant 0 : i32
    %c0_i32_1 = arith.constant 0 : i32
    %c0_i32_2 = arith.constant 0 : i32
    %c0_i32_3 = arith.constant 0 : i32
    %0 = tpu.memref_slice %arg0[%c0_i32, %c0_i32_2, %c0_i32_3] : memref<1x8x256xf32, #tpu.memory_space<any>> -> memref<1x8x256xf32, #tpu.memory_space<any>>
    %1 = tpu.memref_squeeze %0 : memref<1x8x256xf32, #tpu.memory_space<any>> -> memref<8x256xf32, #tpu.memory_space<any>>
    %c0_i32_4 = arith.constant 0 : i32
    %c0_i32_5 = arith.constant 0 : i32
    %2 = tpu.memref_slice %arg1[%c0_i32_0, %c0_i32_4, %c0_i32_5] : memref<1x8x256xf32, #tpu.memory_space<any>> -> memref<1x8x256xf32, #tpu.memory_space<any>>
    %3 = tpu.memref_squeeze %2 : memref<1x8x256xf32, #tpu.memory_space<any>> -> memref<8x256xf32, #tpu.memory_space<any>>
    %4 = tpu.memref_slice %arg2[%c0_i32_1] : memref<1x!tpu.dma_semaphore, #tpu.memory_space<semaphore_mem>> -> memref<1x!tpu.dma_semaphore, #tpu.memory_space<semaphore_mem>>
    %5 = tpu.memref_squeeze %4 : memref<1x!tpu.dma_semaphore, #tpu.memory_space<semaphore_mem>> -> memref<!tpu.dma_semaphore, #tpu.memory_space<semaphore_mem>>
    tpu.enqueue_dma source(%1 : memref<8x256xf32, #tpu.memory_space<any>>) target(%3 : memref<8x256xf32, #tpu.memory_space<any>>) target_semaphore(%5 : memref<!tpu.dma_semaphore, #tpu.memory_space<semaphore_mem>>)
    %c0_i32_6 = arith.constant 0 : i32
    %c0_i32_7 = arith.constant 0 : i32
    %c0_i32_8 = arith.constant 0 : i32
    %c0_i32_9 = arith.constant 0 : i32
    %c0_i32_10 = arith.constant 0 : i32
    %6 = tpu.memref_slice %arg0[%c0_i32_6, %c0_i32_9, %c0_i32_10] : memref<1x8x256xf32, #tpu.memory_space<any>> -> memref<1x8x256xf32, #tpu.memory_space<any>>
    %7 = tpu.memref_squeeze %6 : memref<1x8x256xf32, #tpu.memory_space<any>> -> memref<8x256xf32, #tpu.memory_space<any>>
    %c0_i32_11 = arith.constant 0 : i32
    %c0_i32_12 = arith.constant 0 : i32
    %8 = tpu.memref_slice %arg1[%c0_i32_7, %c0_i32_11, %c0_i32_12] : memref<1x8x256xf32, #tpu.memory_space<any>> -> memref<1x8x256xf32, #tpu.memory_space<any>>
    %9 = tpu.memref_squeeze %8 : memref<1x8x256xf32, #tpu.memory_space<any>> -> memref<8x256xf32, #tpu.memory_space<any>>
    %10 = tpu.memref_slice %arg2[%c0_i32_8] : memref<1x!tpu.dma_semaphore, #tpu.memory_space<semaphore_mem>> -> memref<1x!tpu.dma_semaphore, #tpu.memory_space<semaphore_mem>>
    %11 = tpu.memref_squeeze %10 : memref<1x!tpu.dma_semaphore, #tpu.memory_space<semaphore_mem>> -> memref<!tpu.dma_semaphore, #tpu.memory_space<semaphore_mem>>
    tpu.wait_dma2 semaphore(%11 : memref<!tpu.dma_semaphore, #tpu.memory_space<semaphore_mem>>) src(%7 : memref<8x256xf32, #tpu.memory_space<any>>) dst(%9 : memref<8x256xf32, #tpu.memory_space<any>>)
    return
  }
}

</mosaic_0001>

<llo_original>
// kernel: tpu_custom_call.1
$region0: #{tpu_custom_call.1}
  #allocation0 [shape = 'u32[]', space=smem, size = 0x4, offset = 0x4, fixed_abs, tag = 'smem constant byte address 0x4 - core index']
  #allocation1 [shape = 'u32[72,128]{1,0:T(1,128)}', space=vmem, size = 0x9000, scoped, tag = 'internal scratch']
  #allocation2 [shape = 's32[1]{0}', space=sflag, size = 0x4, scoped, tag = 'scratch operand']
  #allocation3 [shape = 's32[]', space=sflag, size = 0x4, offset = 0, fixed_abs, tag = 'sflag constant byte address 0x0 - dummy sync flag']
  #allocation4 [shape = 'u32[0]{0}', space=smem, size = 0, offset = 0, fixed_abs, tag = 'smem constant byte address 0x0 - null']
  %s0 = inlined_call_operand.hbm [shape: f32[1,8,256], index: 0, kind: input, shape index: {}]
  %s1 = inlined_call_operand.hbm [shape: f32[1,8,256], index: 1, kind: output, shape index: {}]
  %s2 = sld [smem:[#allocation0]]
  $region2: #{tpu_custom_call.1} parent=0
    _
  %s4 = ssub.s32 1, %s2
  %s5 = scalar_select 0, %s4, %s2
  %s7 = sshll.u32 1, 14
  %s8 = sxor.u32 4294967295, %s7
  %s10 = sshll.u32 %s0, 4
  %s11 = int_to_ptr.hbm [resolvable:$true] %s10
  %s12 = sshll.u32 %s1, 4
  %s13 = int_to_ptr.hbm [resolvable:$true] %s12
  %16 = dma.general %s11, 256, %s13, [#allocation2], [#allocation3], [#allocation4], 0, 0
  %s17 = smul.u32 8, 1
  %s18 = smul.u32 %s17, 2
  %s19 = sshll.u32 %s18, 4
  %20 = dma.done [#allocation2], %s19
  %21 = vsyncmov [#allocation2]
  %s22 = vpop.sfrf %21
  %p23 = scmp.eq.s32.totalorder %s22, 0
  %p24 = pneg %p23
  %26 = shalt.err (%p24)

</llo_original>
